<compile_context>
chip_gen: v7x
topology: tpu7x:2x2x1
jax: 0.10.0
libtpu: 0.0.40
codegen_flags: <defaults>
</compile_context>

<pallas_src>
import functools

import jax
import jax.numpy as jnp
from jax.experimental import pallas as pl
from jax.experimental.pallas import tpu as pltpu

RMS_EPS = 1e-6
LANE = 128


def _round_up(v, m):
    return ((v + m - 1) // m) * m


# --------------------------------------------------------------------------- #
# Kernel
# --------------------------------------------------------------------------- #
def _lf_kernel(inv_e, x_ref, seed1_ref, seed2_ref, w1_ref, b1_ref, w2_ref,
               b2_ref, g_ref, out_ref, lf2_out_ref, prev1_sc, prev2_sc):
    # x_ref:        (TS, Ep)   one time-tile of one batch element (input dtype)
    # seed1_ref:    (1, Hp)    tap0_1 @ lf1_cache  (prev-tap product at t=-1)
    # seed2_ref:    (1, Ep)    tap0_2 @ lf2_cache
    # w1_ref:       (Ep, 2Hp)  bf16, cols [0:Hp]  = tap0 (applied to x[t-1]),
    #                               cols [Hp:2Hp] = tap1 (applied to x[t])
    # w2_ref:       (Hp, 2Ep)  bf16, same layout
    # b1/b2/g:      (1,Hp)/(1,Ep)/(1,Ep) f32
    # out_ref:      (TS, Ep)   normalized output tile (input dtype)
    # lf2_out_ref:  (1, Hp)    new conv2-input cache row (written at last tile)
    # prev1_sc:     (1, Hp)    carried y1[-1, :Hp] of the previous time tile
    # prev2_sc:     (1, Ep)    carried y2[-1, :Ep] of the previous time tile
    s_idx = pl.program_id(1)

    # Seed the carried prev-tap rows at the first time tile of every batch
    # element (the grid iterates s fastest, so this runs before any other tile
    # of this batch element reads the scratch).
    @pl.when(s_idx == 0)
    def _():
        prev1_sc[...] = seed1_ref[...]
        prev2_sc[...] = seed2_ref[...]

    x = x_ref[...]                                          # (TS, Ep)
    ts = x.shape[0]
    hp = prev1_sc.shape[-1]
    ep = prev2_sc.shape[-1]
    row0 = jax.lax.broadcasted_iota(jnp.int32, (ts, 1), 0) == 0

    # ---- conv1: out1[t] = tap0 @ x[t-1] + tap1 @ x[t] + b1.
    # One fused matmul on the raw tile; the tap0 block is shifted down one row
    # with a sublane roll (XLU) and row 0 comes from the carried history.
    y1 = jnp.dot(x.astype(jnp.bfloat16), w1_ref[...],
                 preferred_element_type=jnp.float32)        # (TS, 2Hp) f32
    y1_prev = y1[:, :hp]
    prev1 = jnp.where(row0, prev1_sc[...],
                      pltpu.roll(y1_prev, shift=1, axis=0))
    out1 = prev1 + y1[:, hp:] + b1_ref[...]                 # (TS, Hp) f32

    # ---- conv2: identical structure on out1.
    y2 = jnp.dot(out1.astype(jnp.bfloat16), w2_ref[...],
                 preferred_element_type=jnp.float32)        # (TS, 2Ep) f32
    y2_prev = y2[:, :ep]
    prev2 = jnp.where(row0, prev2_sc[...],
                      pltpu.roll(y2_prev, shift=1, axis=0))
    out2 = prev2 + y2[:, ep:] + b2_ref[...]                 # (TS, Ep) f32

    # ---- residual + RMSNorm (LlamaRMSNorm, eps=1e-6).  The divisor is the
    # *unpadded* E (padded columns of out3 are exactly zero).  Single store.
    out3 = out2 + x.astype(jnp.float32)
    var = jnp.sum(out3 * out3, axis=-1, keepdims=True) * inv_e
    out_ref[...] = ((out3 * jax.lax.rsqrt(var + RMS_EPS)) * g_ref[...]
                    ).astype(out_ref.dtype)

    # ---- carry this tile's last prev-tap rows to the next time tile.
    prev1_sc[...] = y1_prev[ts - 1:, :]
    prev2_sc[...] = y2_prev[ts - 1:, :]

    # ---- new lf2 cache = conv1 output at the final time step (write once).
    @pl.when(s_idx == pl.num_programs(1) - 1)
    def _():
        lf2_out_ref[...] = out1[ts - 1:, :]


# --------------------------------------------------------------------------- #
# Wrapper
# --------------------------------------------------------------------------- #
def prepare_lf_params(w1, b1, w2, b2, g):
    """One-time weight preparation (call once when serving; reuse per call).

    w1: (H, E, 2, 1) conv1.weight; b1: (H,); w2: (E, H, 2, 1); b2: (E,); g: (E,).
    """
    H, E = int(w1.shape[0]), int(w1.shape[1])
    assert w1.shape == (H, E, 2, 1) and w2.shape == (E, H, 2, 1)
    E_p, H_p = _round_up(E, LANE), _round_up(H, LANE)

    def pad2(a, r, c):
        return jnp.pad(a.astype(jnp.float32),
                       ((0, r - a.shape[0]), (0, c - a.shape[1])))

    def pad1(a, n):
        return jnp.pad(a.astype(jnp.float32), (0, n - a.shape[0])).reshape(1, n)

    t0_1 = pad2(w1[:, :, 0, 0], H_p, E_p)   # tap applied to x[t-1]
    t1_1 = pad2(w1[:, :, 1, 0], H_p, E_p)   # tap applied to x[t]
    t0_2 = pad2(w2[:, :, 0, 0], E_p, H_p)
    t1_2 = pad2(w2[:, :, 1, 0], E_p, H_p)

    w1c = jnp.concatenate([t0_1.T, t1_1.T], axis=1).astype(jnp.bfloat16)  # (Ep,2Hp)
    w2c = jnp.concatenate([t0_2.T, t1_2.T], axis=1).astype(jnp.bfloat16)  # (Hp,2Ep)

    return dict(E=E, H=H, E_p=E_p, H_p=H_p, w1c=w1c, w2c=w2c,
                b1=pad1(b1, H_p), b2=pad1(b2, E_p), g=pad1(g, E_p))


def _vmem_capacity_bytes():
    try:
        return int(pltpu.get_tpu_info().vmem_capacity_bytes)
    except Exception:
        return 64 << 20   # conservative (v7x per-core VMEM); v5e/v6e have 128 MiB


def _footprint_bytes(ts, e_p, h_p, x_bytes, out_bytes, weight_buffers):
    io = 2 * ts * e_p * (x_bytes + out_bytes)                 # dbl-buffered x/out
    w = weight_buffers * 2 * (e_p * 2 * h_p + h_p * 2 * e_p)  # bf16 fused weights
    small = 32 * (3 * e_p + 3 * h_p)                          # biases/seeds/carry
    tmp = 4 * ts * (5 * e_p + 4 * h_p)                        # f32 intermediates
    tmp += 2 * ts * (e_p + h_p)                               # bf16 operand copies
    return io + w + small + tmp


def localized_filtering_prepared(x, lf1_cache, lf2_cache, params, *,
                                 seq_tile=None, weight_buffer_count=None):
    """x: (B, S, E); lf1_cache: (B, E, 1, 1); lf2_cache: (B, H, 1, 1)."""
    B, S, E = x.shape
    H, E_p, H_p = params["H"], params["E_p"], params["H_p"]
    assert E == params["E"]
    x_bytes = jnp.dtype(x.dtype).itemsize
    wb = weight_buffer_count if weight_buffer_count is not None else 2

    # Generation-aware VMEM budget and time-tile selection.
    vmem_phys = _vmem_capacity_bytes()
    budget = min(int(0.80 * vmem_phys), 100 << 20)
    if seq_tile is None:
        divisors = [c for c in (1024, 512, 256, 128, 64, 32, 16, 8)
                    if c <= S and S % c == 0]
        seq_tile = divisors[-1] if divisors else S
        for cand in divisors:   # largest candidate that fits VMEM
            if _footprint_bytes(cand, E_p, H_p, x_bytes, x_bytes, wb) <= budget:
                seq_tile = cand
                break
    assert S % seq_tile == 0, "seq_tile must divide S"
    ts = seq_tile
    n_s = S // ts

    est = _footprint_bytes(ts, E_p, H_p, x_bytes, x_bytes, wb)
    vmem_limit = int(min(max(est + (2 << 20), 16 << 20),
                         min(int(0.90 * vmem_phys), 100 << 20)))

    # Pad activations / caches to the lane-aligned feature dims.
    x_p = jnp.pad(x, ((0, 0), (0, 0), (0, E_p - E))) if E_p != E else x
    lf1 = lf1_cache.reshape(B, 1, E).astype(jnp.float32)
    lf2 = lf2_cache.reshape(B, 1, H).astype(jnp.float32)
    if E_p != E:
        lf1 = jnp.pad(lf1, ((0, 0), (0, 0), (0, E_p - E)))
    if H_p != H:
        lf2 = jnp.pad(lf2, ((0, 0), (0, 0), (0, H_p - H)))

    # Per-batch seeds = prev-tap products of the cached last rows (tiny matmuls,
    # O(B*E*H); same bf16 precision as the in-kernel path).
    seed1 = jnp.einsum("bre,eh->brh", lf1.astype(jnp.bfloat16),
                       params["w1c"][:, :H_p],
                       preferred_element_type=jnp.float32)         # (B,1,Hp)
    seed2 = jnp.einsum("brh,he->bre", lf2.astype(jnp.bfloat16),
                       params["w2c"][:, :E_p],
                       preferred_element_type=jnp.float32)         # (B,1,Ep)

    # Optional single-buffering for the resident (constant index_map) operands;
    # pass weight_buffer_count=1 on v7x (64 MiB VMEM) to halve weight residency.
    pipeline_mode = (pl.Buffered(weight_buffer_count)
                     if weight_buffer_count is not None else None)

    def const_spec(shape):
        if pipeline_mode is None:
            return pl.BlockSpec(shape, lambda b, s: (0, 0))
        return pl.BlockSpec(shape, lambda b, s: (0, 0),
                            pipeline_mode=pipeline_mode)

    cost = pl.CostEstimate(
        flops=int(8 * B * S * E_p * H_p),
        transcendentals=int(B * S),
        bytes_accessed=int(2 * B * S * E_p * x_bytes + 8 * E_p * H_p
                           + 8 * B * (E_p + H_p)),
    )

    out_p, lf2_out = pl.pallas_call(
        functools.partial(_lf_kernel, 1.0 / float(E)),
        out_shape=(
            jax.ShapeDtypeStruct((B, S, E_p), x.dtype),
            jax.ShapeDtypeStruct((B, 1, H_p), jnp.float32),
        ),
        grid_spec=pltpu.PrefetchScalarGridSpec(
            num_scalar_prefetch=0,
            grid=(B, n_s),
            in_specs=[
                pl.BlockSpec((pl.Squeezed(), ts, E_p), lambda b, s: (b, s, 0)),
                pl.BlockSpec((pl.Squeezed(), 1, H_p), lambda b, s: (b, 0, 0)),
                pl.BlockSpec((pl.Squeezed(), 1, E_p), lambda b, s: (b, 0, 0)),
                const_spec((E_p, 2 * H_p)),
                const_spec((1, H_p)),
                const_spec((H_p, 2 * E_p)),
                const_spec((1, E_p)),
                const_spec((1, E_p)),
            ],
            out_specs=(
                pl.BlockSpec((pl.Squeezed(), ts, E_p), lambda b, s: (b, s, 0)),
                pl.BlockSpec((pl.Squeezed(), 1, H_p), lambda b, s: (b, 0, 0)),
            ),
            scratch_shapes=[
                pltpu.VMEM((1, H_p), jnp.float32),   # carried y1[-1, :Hp]
                pltpu.VMEM((1, E_p), jnp.float32),   # carried y2[-1, :Ep]
            ],
        ),
        compiler_params=pltpu.CompilerParams(
            # Time axis MUST stay innermost + "arbitrary" (sequential carry).
            dimension_semantics=("parallel", "arbitrary"),
            vmem_limit_bytes=vmem_limit,
        ),
        cost_estimate=cost,
    )(x_p, seed1, seed2, params["w1c"], params["b1"], params["w2c"],
      params["b2"], params["g"])

    # TODO(synk): if B < 2 per chip on v7x, only one TensorCore is used; a
    # column split of the fused weights would be needed to use both.
    out = out_p[..., :E] if E_p != E else out_p
    lf1_new = x[:, S - 1, :].reshape(B, E, 1, 1)            # last input row
    lf2_new = lf2_out[:, :, :H].reshape(B, H, 1, 1)         # last conv1 row
    return out, lf1_new, lf2_new


def localized_filtering(x, lf1_cache, lf2_cache, w1, b1, w2, b2, g, *,
                        seq_tile=None, weight_buffer_count=None):
    """Convenience wrapper (prepares weights per call; prefer the prepared path)."""
    params = prepare_lf_params(w1, b1, w2, b2, g)
    return localized_filtering_prepared(x, lf1_cache, lf2_cache, params,
                                        seq_tile=seq_tile,
                                        weight_buffer_count=weight_buffer_count)


# --------------------------------------------------------------------------- #
# Reference (plain JAX mirror of the PyTorch forward) + test
# --------------------------------------------------------------------------- #
def _reference(x, lf1_cache, lf2_cache, w1, b1, w2, b2, g):
    xp = jnp.transpose(x, (1, 0, 2))                         # (S, B, E)
    residual = xp
    inp = jnp.transpose(xp[:, None], (2, 3, 0, 1))           # (B, E, S, 1) NCHW
    inp = jnp.concatenate([lf1_cache, inp], axis=2)          # (B, E, S+1, 1)
    dn = ('NCHW', 'OIHW', 'NCHW')
    o1 = jax.lax.conv_general_dilated(inp, w1, (1, 1), 'VALID',
                                      dimension_numbers=dn) + b1[None, :, None, None]
    o1c = jnp.concatenate([lf2_cache, o1], axis=2)           # (B, H, S+1, 1)
    o2 = jax.lax.conv_general_dilated(o1c, w2, (1, 1), 'VALID',
                                      dimension_numbers=dn) + b2[None, :, None, None]
    o2 = jnp.transpose(o2, (2, 3, 0, 1)).reshape(residual.shape)
    o3 = o2 + residual
    var = jnp.mean(o3 * o3, axis=-1, keepdims=True)
    lf = g * (o3 * jax.lax.rsqrt(var + RMS_EPS))
    return (jnp.transpose(lf, (1, 0, 2)),
            inp[:, :, -1:, :], o1c[:, :, -1:, :])


if __name__ == "__main__":
    B, S, E = 2, 16, 32
    H = E // 2

    key = jax.random.PRNGKey(0)
    k = jax.random.split(key, 8)
    w1 = jax.random.normal(k[0], (H, E, 2, 1), jnp.float32) * 0.05   # conv1.weight
    b1 = jax.random.normal(k[1], (H,), jnp.float32) * 0.05           # conv1.bias
    w2 = jax.random.normal(k[2], (E, H, 2, 1), jnp.float32) * 0.05   # conv2.weight
    b2 = jax.random.normal(k[3], (E,), jnp.float32) * 0.05           # conv2.bias
    g = 1.0 + 0.1 * jax.random.normal(k[4], (E,), jnp.float32)       # RMSNorm weight

    x = jax.random.normal(k[5], (B, S, E), jnp.float32)
    lf1_cache = jax.random.normal(k[6], (B, E, 1, 1), jnp.float32)
    lf2_cache = jax.random.normal(k[7], (B, H, 1, 1), jnp.float32)

    # Prepare weights once (serving-style), then call the kernel.
    # seq_tile=8 -> two time tiles per batch element: exercises the carried
    # prev-tap-row scratch (roll + row-0 fixup) across tile boundaries.
    params = prepare_lf_params(w1, b1, w2, b2, g)
    out, lf1_new, lf2_new = localized_filtering_prepared(
        x, lf1_cache, lf2_cache, params, seq_tile=8)
    jax.block_until_ready((out, lf1_new, lf2_new))

    ref_out, ref_lf1, ref_lf2 = _reference(x, lf1_cache, lf2_cache,
                                           w1, b1, w2, b2, g)
    assert out.shape == (B, S, E)
    assert lf1_new.shape == (B, E, 1, 1) and lf2_new.shape == (B, H, 1, 1)
    # bf16 matmul operands (f32 accumulation) -> slightly looser tolerance.
    assert jnp.allclose(out, ref_out, rtol=2e-2, atol=2e-2)
    assert jnp.allclose(lf1_new, ref_lf1, rtol=2e-2, atol=2e-2)
    assert jnp.allclose(lf2_new, ref_lf2, rtol=2e-2, atol=2e-2)

    print("KERNEL_OK")
</pallas_src>

<mosaic_0001>
module attributes {stable_mosaic.version = 11 : i64} {
  func.func @_lf_kernel(%arg0: i32, %arg1: i32, %arg2: memref<1x8x128xf32, #tpu.memory_space<vmem>>, %arg3: memref<1x1x128xf32, #tpu.memory_space<vmem>>, %arg4: memref<1x1x128xf32, #tpu.memory_space<vmem>>, %arg5: memref<128x256xbf16, #tpu.memory_space<vmem>>, %arg6: memref<1x128xf32, #tpu.memory_space<vmem>>, %arg7: memref<128x256xbf16, #tpu.memory_space<vmem>>, %arg8: memref<1x128xf32, #tpu.memory_space<vmem>>, %arg9: memref<1x128xf32, #tpu.memory_space<vmem>>, %arg10: memref<1x8x128xf32, #tpu.memory_space<vmem>>, %arg11: memref<1x1x128xf32, #tpu.memory_space<vmem>>, %arg12: memref<1x128xf32, #tpu.memory_space<vmem>>, %arg13: memref<1x128xf32, #tpu.memory_space<vmem>>) attributes {dimension_semantics = [#tpu.dimension_semantics<parallel>, #tpu.dimension_semantics<arbitrary>], iteration_bounds = array<i64: 2, 2>, scalar_prefetch = 0 : i64, scratch_operands = 2 : i64, tpu.core_type = #tpu.core_type<tc>, window_params = [{transform_indices = @transform_0, window_bounds = array<i64: 1, 8, 128>}, {transform_indices = @transform_1, window_bounds = array<i64: 1, 1, 128>}, {transform_indices = @transform_2, window_bounds = array<i64: 1, 1, 128>}, {pipeline_mode = #tpu.pipeline_mode<synchronous>, transform_indices = @transform_3, window_bounds = array<i64: 128, 256>}, {pipeline_mode = #tpu.pipeline_mode<synchronous>, transform_indices = @transform_4, window_bounds = array<i64: 1, 128>}, {pipeline_mode = #tpu.pipeline_mode<synchronous>, transform_indices = @transform_5, window_bounds = array<i64: 128, 256>}, {pipeline_mode = #tpu.pipeline_mode<synchronous>, transform_indices = @transform_6, window_bounds = array<i64: 1, 128>}, {pipeline_mode = #tpu.pipeline_mode<synchronous>, transform_indices = @transform_7, window_bounds = array<i64: 1, 128>}, {transform_indices = @transform_8, window_bounds = array<i64: 1, 8, 128>}, {transform_indices = @transform_9, window_bounds = array<i64: 1, 1, 128>}]} {
    %c0_i32 = arith.constant 0 : i32
    %0 = arith.cmpi eq, %arg1, %c0_i32 : i32
    %1 = arith.extui %0 : i1 to i32
    %c0_i32_0 = arith.constant 0 : i32
    %2 = arith.cmpi ne, %1, %c0_i32_0 : i32
    scf.if %2 {
      %c0_32 = arith.constant 0 : index
      %c0_33 = arith.constant 0 : index
      %c0_34 = arith.constant 0 : index
      %64 = vector.load %arg3[%c0_32, %c0_33, %c0_34] : memref<1x1x128xf32, #tpu.memory_space<vmem>>, vector<1x1x128xf32>
      %65 = vector.shape_cast %64 : vector<1x1x128xf32> to vector<1x128xf32>
      %c0_35 = arith.constant 0 : index
      %c0_36 = arith.constant 0 : index
      %66 = vector.load %arg12[%c0_35, %c0_36] : memref<1x128xf32, #tpu.memory_space<vmem>>, vector<1x128xf32>
      tpu.vector_store %arg12[%c0_35, %c0_36], %65 {strides = array<i32>} : memref<1x128xf32, #tpu.memory_space<vmem>>, vector<1x128xf32>,
      %c0_37 = arith.constant 0 : index
      %c0_38 = arith.constant 0 : index
      %c0_39 = arith.constant 0 : index
      %67 = vector.load %arg4[%c0_37, %c0_38, %c0_39] : memref<1x1x128xf32, #tpu.memory_space<vmem>>, vector<1x1x128xf32>
      %68 = vector.shape_cast %67 : vector<1x1x128xf32> to vector<1x128xf32>
      %c0_40 = arith.constant 0 : index
      %c0_41 = arith.constant 0 : index
      %69 = vector.load %arg13[%c0_40, %c0_41] : memref<1x128xf32, #tpu.memory_space<vmem>>, vector<1x128xf32>
      tpu.vector_store %arg13[%c0_40, %c0_41], %68 {strides = array<i32>} : memref<1x128xf32, #tpu.memory_space<vmem>>, vector<1x128xf32>,
    } else {
    }
    %c0 = arith.constant 0 : index
    %c0_1 = arith.constant 0 : index
    %c0_2 = arith.constant 0 : index
    %3 = vector.load %arg2[%c0, %c0_1, %c0_2] : memref<1x8x128xf32, #tpu.memory_space<vmem>>, vector<1x8x128xf32>
    %4 = vector.shape_cast %3 : vector<1x8x128xf32> to vector<8x128xf32>
    %5 = tpu.iota {dimensions = array<i32: 0>} : vector<8x1xi32>
    %c0_i32_3 = arith.constant 0 : i32
    %6 = vector.broadcast %c0_i32_3 : i32 to vector<8x1xi32>
    %7 = arith.cmpi eq, %5, %6 : vector<8x1xi32>
    %8 = arith.truncf %4 : vector<8x128xf32> to vector<8x128xbf16>
    %c0_4 = arith.constant 0 : index
    %c0_5 = arith.constant 0 : index
    %9 = vector.load %arg5[%c0_4, %c0_5] : memref<128x256xbf16, #tpu.memory_space<vmem>>, vector<128x256xbf16>
    %cst = arith.constant dense<0.000000e+00> : vector<8x256xf32>
    %10 = tpu.matmul %8, %9, %cst {dimension_numbers = #tpu.dot_dimension_numbers<[1], [0], [0], [1], [0, 0, 1, 1], [], []>} : vector<8x128xbf16>, vector<128x256xbf16>, vector<8x256xf32> -> vector<8x256xf32>
    %11 = vector.extract_strided_slice %10 {offsets = [0, 0], sizes = [8, 128], strides = [1, 1]} : vector<8x256xf32> to vector<8x128xf32>
    %c0_6 = arith.constant 0 : index
    %c0_7 = arith.constant 0 : index
    %12 = vector.load %arg12[%c0_6, %c0_7] : memref<1x128xf32, #tpu.memory_space<vmem>>, vector<1x128xf32>
    %c1_i32 = arith.constant 1 : i32
    %13 = tpu.dynamic_rotate %11 by %c1_i32 dim 0 : vector<8x128xf32>, i32 -> vector<8x128xf32>
    %14 = vector.shape_cast %7 : vector<8x1xi1> to vector<8x1xi1>
    %15 = vector.broadcast %14 : vector<8x1xi1> to vector<8x128xi1>
    %16 = vector.shape_cast %12 : vector<1x128xf32> to vector<1x128xf32>
    %17 = vector.broadcast %16 : vector<1x128xf32> to vector<8x128xf32>
    %18 = arith.select %15, %17, %13 : vector<8x128xi1>, vector<8x128xf32>
    %19 = vector.extract_strided_slice %10 {offsets = [0, 128], sizes = [8, 128], strides = [1, 1]} : vector<8x256xf32> to vector<8x128xf32>
    %20 = arith.addf %18, %19 : vector<8x128xf32>
    %c0_8 = arith.constant 0 : index
    %c0_9 = arith.constant 0 : index
    %21 = vector.load %arg6[%c0_8, %c0_9] : memref<1x128xf32, #tpu.memory_space<vmem>>, vector<1x128xf32>
    %22 = vector.broadcast %21 : vector<1x128xf32> to vector<8x128xf32>
    %23 = arith.addf %20, %22 : vector<8x128xf32>
    %24 = arith.truncf %23 : vector<8x128xf32> to vector<8x128xbf16>
    %c0_10 = arith.constant 0 : index
    %c0_11 = arith.constant 0 : index
    %25 = vector.load %arg7[%c0_10, %c0_11] : memref<128x256xbf16, #tpu.memory_space<vmem>>, vector<128x256xbf16>
    %cst_12 = arith.constant dense<0.000000e+00> : vector<8x256xf32>
    %26 = tpu.matmul %24, %25, %cst_12 {dimension_numbers = #tpu.dot_dimension_numbers<[1], [0], [0], [1], [0, 0, 1, 1], [], []>} : vector<8x128xbf16>, vector<128x256xbf16>, vector<8x256xf32> -> vector<8x256xf32>
    %27 = vector.extract_strided_slice %26 {offsets = [0, 0], sizes = [8, 128], strides = [1, 1]} : vector<8x256xf32> to vector<8x128xf32>
    %c0_13 = arith.constant 0 : index
    %c0_14 = arith.constant 0 : index
    %28 = vector.load %arg13[%c0_13, %c0_14] : memref<1x128xf32, #tpu.memory_space<vmem>>, vector<1x128xf32>
    %c1_i32_15 = arith.constant 1 : i32
    %29 = tpu.dynamic_rotate %27 by %c1_i32_15 dim 0 : vector<8x128xf32>, i32 -> vector<8x128xf32>
    %30 = vector.shape_cast %7 : vector<8x1xi1> to vector<8x1xi1>
    %31 = vector.broadcast %30 : vector<8x1xi1> to vector<8x128xi1>
    %32 = vector.shape_cast %28 : vector<1x128xf32> to vector<1x128xf32>
    %33 = vector.broadcast %32 : vector<1x128xf32> to vector<8x128xf32>
    %34 = arith.select %31, %33, %29 : vector<8x128xi1>, vector<8x128xf32>
    %35 = vector.extract_strided_slice %26 {offsets = [0, 128], sizes = [8, 128], strides = [1, 1]} : vector<8x256xf32> to vector<8x128xf32>
    %36 = arith.addf %34, %35 : vector<8x128xf32>
    %c0_16 = arith.constant 0 : index
    %c0_17 = arith.constant 0 : index
    %37 = vector.load %arg8[%c0_16, %c0_17] : memref<1x128xf32, #tpu.memory_space<vmem>>, vector<1x128xf32>
    %38 = vector.broadcast %37 : vector<1x128xf32> to vector<8x128xf32>
    %39 = arith.addf %36, %38 : vector<8x128xf32>
    %40 = arith.addf %39, %4 : vector<8x128xf32>
    %41 = arith.mulf %40, %40 : vector<8x128xf32>
    %cst_18 = arith.constant dense<0.000000e+00> : vector<8xf32>
    %42 = vector.multi_reduction <add>, %41, %cst_18 [1] : vector<8x128xf32> to vector<8xf32>
    %43 = vector.shape_cast %42 : vector<8xf32> to vector<8x1xf32>
    %cst_19 = arith.constant 3.125000e-02 : f32
    %44 = vector.broadcast %cst_19 : f32 to vector<8x1xf32>
    %45 = arith.mulf %43, %44 : vector<8x1xf32>
    %cst_20 = arith.constant 9.99999997E-7 : f32
    %46 = vector.broadcast %cst_20 : f32 to vector<8x1xf32>
    %47 = arith.addf %45, %46 : vector<8x1xf32>
    %48 = math.rsqrt %47 : vector<8x1xf32>
    %49 = vector.broadcast %48 : vector<8x1xf32> to vector<8x128xf32>
    %50 = arith.mulf %40, %49 : vector<8x128xf32>
    %c0_21 = arith.constant 0 : index
    %c0_22 = arith.constant 0 : index
    %51 = vector.load %arg9[%c0_21, %c0_22] : memref<1x128xf32, #tpu.memory_space<vmem>>, vector<1x128xf32>
    %52 = vector.broadcast %51 : vector<1x128xf32> to vector<8x128xf32>
    %53 = arith.mulf %50, %52 : vector<8x128xf32>
    %c0_23 = arith.constant 0 : index
    %c0_24 = arith.constant 0 : index
    %c0_25 = arith.constant 0 : index
    %54 = vector.load %arg10[%c0_23, %c0_24, %c0_25] : memref<1x8x128xf32, #tpu.memory_space<vmem>>, vector<1x8x128xf32>
    %55 = vector.shape_cast %54 : vector<1x8x128xf32> to vector<8x128xf32>
    %56 = vector.shape_cast %53 : vector<8x128xf32> to vector<1x8x128xf32>
    tpu.vector_store %arg10[%c0_23, %c0_24, %c0_25], %56 {strides = array<i32>} : memref<1x8x128xf32, #tpu.memory_space<vmem>>, vector<1x8x128xf32>,
    %57 = vector.extract_strided_slice %11 {offsets = [7, 0], sizes = [1, 128], strides = [1, 1]} : vector<8x128xf32> to vector<1x128xf32>
    %c0_26 = arith.constant 0 : index
    %c0_27 = arith.constant 0 : index
    %58 = vector.load %arg12[%c0_26, %c0_27] : memref<1x128xf32, #tpu.memory_space<vmem>>, vector<1x128xf32>
    tpu.vector_store %arg12[%c0_26, %c0_27], %57 {strides = array<i32>} : memref<1x128xf32, #tpu.memory_space<vmem>>, vector<1x128xf32>,
    %59 = vector.extract_strided_slice %27 {offsets = [7, 0], sizes = [1, 128], strides = [1, 1]} : vector<8x128xf32> to vector<1x128xf32>
    %c0_28 = arith.constant 0 : index
    %c0_29 = arith.constant 0 : index
    %60 = vector.load %arg13[%c0_28, %c0_29] : memref<1x128xf32, #tpu.memory_space<vmem>>, vector<1x128xf32>
    tpu.vector_store %arg13[%c0_28, %c0_29], %59 {strides = array<i32>} : memref<1x128xf32, #tpu.memory_space<vmem>>, vector<1x128xf32>,
    %c1_i32_30 = arith.constant 1 : i32
    %61 = arith.cmpi eq, %arg1, %c1_i32_30 : i32
    %62 = arith.extui %61 : i1 to i32
    %c0_i32_31 = arith.constant 0 : i32
    %63 = arith.cmpi ne, %62, %c0_i32_31 : i32
    scf.if %63 {
      %64 = vector.extract_strided_slice %23 {offsets = [7, 0], sizes = [1, 128], strides = [1, 1]} : vector<8x128xf32> to vector<1x128xf32>
      %c0_32 = arith.constant 0 : index
      %c0_33 = arith.constant 0 : index
      %c0_34 = arith.constant 0 : index
      %65 = vector.load %arg11[%c0_32, %c0_33, %c0_34] : memref<1x1x128xf32, #tpu.memory_space<vmem>>, vector<1x1x128xf32>
      %66 = vector.shape_cast %65 : vector<1x1x128xf32> to vector<1x128xf32>
      %67 = vector.shape_cast %64 : vector<1x128xf32> to vector<1x1x128xf32>
      tpu.vector_store %arg11[%c0_32, %c0_33, %c0_34], %67 {strides = array<i32>} : memref<1x1x128xf32, #tpu.memory_space<vmem>>, vector<1x1x128xf32>,
    } else {
    }
    return
  }
  func.func @transform_0(%arg0: i32, %arg1: i32) -> (i32, i32, i32) {
    %c0_i32 = arith.constant 0 : i32
    %c0_i32_0 = arith.constant 0 : i32
    return %arg0, %arg1, %c0_i32 : i32, i32, i32
  }
  func.func @transform_1(%arg0: i32, %arg1: i32) -> (i32, i32, i32) {
    %c0_i32 = arith.constant 0 : i32
    %c0_i32_0 = arith.constant 0 : i32
    %c0_i32_1 = arith.constant 0 : i32
    return %arg0, %c0_i32, %c0_i32_0 : i32, i32, i32
  }
  func.func @transform_2(%arg0: i32, %arg1: i32) -> (i32, i32, i32) {
    %c0_i32 = arith.constant 0 : i32
    %c0_i32_0 = arith.constant 0 : i32
    %c0_i32_1 = arith.constant 0 : i32
    return %arg0, %c0_i32, %c0_i32_0 : i32, i32, i32
  }
  func.func @transform_3(%arg0: i32, %arg1: i32) -> (i32, i32) {
    %c0_i32 = arith.constant 0 : i32
    %c0_i32_0 = arith.constant 0 : i32
    %c0_i32_1 = arith.constant 0 : i32
    return %c0_i32, %c0_i32_0 : i32, i32
  }
  func.func @transform_4(%arg0: i32, %arg1: i32) -> (i32, i32) {
    %c0_i32 = arith.constant 0 : i32
    %c0_i32_0 = arith.constant 0 : i32
    %c0_i32_1 = arith.constant 0 : i32
    return %c0_i32, %c0_i32_0 : i32, i32
  }
  func.func @transform_5(%arg0: i32, %arg1: i32) -> (i32, i32) {
    %c0_i32 = arith.constant 0 : i32
    %c0_i32_0 = arith.constant 0 : i32
    %c0_i32_1 = arith.constant 0 : i32
    return %c0_i32, %c0_i32_0 : i32, i32
  }
  func.func @transform_6(%arg0: i32, %arg1: i32) -> (i32, i32) {
    %c0_i32 = arith.constant 0 : i32
    %c0_i32_0 = arith.constant 0 : i32
    %c0_i32_1 = arith.constant 0 : i32
    return %c0_i32, %c0_i32_0 : i32, i32
  }
  func.func @transform_7(%arg0: i32, %arg1: i32) -> (i32, i32) {
    %c0_i32 = arith.constant 0 : i32
    %c0_i32_0 = arith.constant 0 : i32
    %c0_i32_1 = arith.constant 0 : i32
    return %c0_i32, %c0_i32_0 : i32, i32
  }
  func.func @transform_8(%arg0: i32, %arg1: i32) -> (i32, i32, i32) {
    %c0_i32 = arith.constant 0 : i32
    %c0_i32_0 = arith.constant 0 : i32
    return %arg0, %arg1, %c0_i32 : i32, i32, i32
  }
  func.func @transform_9(%arg0: i32, %arg1: i32) -> (i32, i32, i32) {
    %c0_i32 = arith.constant 0 : i32
    %c0_i32_0 = arith.constant 0 : i32
    %c0_i32_1 = arith.constant 0 : i32
    return %arg0, %c0_i32, %c0_i32_0 : i32, i32, i32
  }
}

</mosaic_0001>

<llo_original>
// kernel: tpu_custom_call.1
$region0: #{tpu_custom_call.1}
  #allocation0 [shape = 'u32[]', space=smem, size = 0x4, offset = 0x4, fixed_abs, tag = 'smem constant byte address 0x4 - core index']
  #allocation1 [shape = 'u32[144,128]{1,0:T(1,128)}', space=vmem, size = 0x12000, scoped, tag = 'internal scratch']
  #allocation2 [shape = 'f32[1,128]{1,0:T(1,128)}', space=vmem, size = 0x200, scoped, tag = 'scratch operand']
  #allocation3 [shape = 'f32[1,128]{1,0:T(1,128)}', space=vmem, size = 0x200, scoped, tag = 'scratch operand']
  %s0 = inlined_call_operand.hbm [shape: f32[2,16,128], index: 0, kind: input, shape index: {}]
  %s1 = inlined_call_operand.vmem [shape: f32[2,1,128], index: 1, kind: input, shape index: {}]
  %s2 = inlined_call_operand.vmem [shape: f32[2,1,128], index: 2, kind: input, shape index: {}]
  %s3 = inlined_call_operand.hbm [shape: bf16[128,256], index: 3, kind: input, shape index: {}]
  %s4 = inlined_call_operand.vmem [shape: f32[1,128], index: 4, kind: input, shape index: {}]
  %s5 = inlined_call_operand.hbm [shape: bf16[128,256], index: 5, kind: input, shape index: {}]
  %s6 = inlined_call_operand.vmem [shape: f32[1,128], index: 6, kind: input, shape index: {}]
  %s7 = inlined_call_operand.vmem [shape: f32[1,128], index: 7, kind: input, shape index: {}]
  %s8 = inlined_call_operand.hbm [shape: f32[2,16,128], index: 8, kind: output, shape index: {0}]
  %s9 = inlined_call_operand.hbm [shape: f32[2,1,128], index: 9, kind: output, shape index: {1}]
  %10 = xla_tuple %s8, %s9
  %s11 = sld [smem:[#allocation0]]
  $region93: #{tpu_custom_call.1} parent=0
    _
  %s13 = ssub.s32 1, %s11
  %s14 = scalar_select 0, %s13, %s11
  $region1: #{tpu_custom_call.1} parent=0
    #allocation4 [shape = 'u8[8192]{0}', space=vmem, size = 0x2000, scoped, tag = 'input window, operand 0']
    #allocation5 [shape = 's32[2]{0}', space=sflag, size = 0x8, scoped, tag = 'scoped memory for tpu_custom_call.1']
    #allocation6 [shape = 's32[2]{0}', space=sflag, size = 0x8, scoped, tag = 'scoped memory for tpu_custom_call.1']
    #allocation7 [shape = 'u8[65536]{0}', space=vmem, size = 0x10000, scoped, tag = 'input window, operand 3, single buffered']
    #allocation8 [shape = 's32[1]{0}', space=sflag, size = 0x4, scoped, tag = 'scoped memory for tpu_custom_call.1']
    #allocation9 [shape = 'u8[65536]{0}', space=vmem, size = 0x10000, scoped, tag = 'input window, operand 5, single buffered']
    #allocation10 [shape = 'u8[8192]{0}', space=vmem, size = 0x2000, scoped, tag = 'output window, operand 0']
    #allocation11 [shape = 'u8[1024]{0}', space=vmem, size = 0x400, scoped, tag = 'output window, operand 1']
    #allocation12 [shape = 's32[2]{0}', space=sflag, size = 0x8, scoped, tag = 'scoped memory for tpu_custom_call.1']
    %15 = vsyncpa [#allocation5], 0
    %s16 = scalar_lea.sflag [#allocation5], 1
    %17 = vsyncpa %s16, 0
    %18 = vsyncpa [#allocation8], 0
    %19 = vsyncpa [#allocation6], 0
    %s20 = scalar_lea.sflag [#allocation6], 1
    %21 = vsyncpa %s20, 0
    %22 = vsyncpa [#allocation12], 0
    %s23 = scalar_lea.sflag [#allocation12], 1
    %24 = vsyncpa %s23, 0
    loop: start=0, step=1, limit=6
    $region2: #{tpu_custom_call.1} parent=1 // loop_pre_header
      _
    $region3: #{tpu_custom_call.1} parent=1 // loop_header
      %s26 = sphi 0, %s30
      %p27 = scmp.ge.s32.totalorder %s26, 6
      %s33 = sphi 0, %s45
      %s34 = sphi 0, %s41
      %s35 = sphi 0, %s33
      %s36 = sphi 0, %s34
      %s37 = sphi 0, %s35
      %s38 = sphi 0, %s36
      %s50 = sphi 0, %s52
      %s53 = sphi 0, %s50
      %s54 = sphi 0, %s53
      %s70 = sphi 0, %s54
      %s76 = sphi 0, %s78
      %s79 = sphi 0, %s76
      %s80 = sphi 0, %s79
      %s96 = sphi 0, %s80
      %s102 = sphi 0, %s104
      %s105 = sphi 0, %s102
      %s106 = sphi 0, %s105
      %s122 = sphi 0, %s106
      %s126 = sphi 0, %s126
      %s128 = sphi 0, %s126
      %s129 = sphi 0, %s128
      %s143 = sphi 0, %s129
      %s147 = sphi 0, %s147
      %s149 = sphi 0, %s147
      %s150 = sphi 0, %s149
      %s164 = sphi 0, %s150
      %s168 = sphi 0, %s168
      %s170 = sphi 0, %s168
      %s171 = sphi 0, %s170
      %s185 = sphi 0, %s171
      %s189 = sphi 0, %s189
      %s191 = sphi 0, %s189
      %s192 = sphi 0, %s191
      %s206 = sphi 0, %s192
      %s210 = sphi 0, %s210
      %s212 = sphi 0, %s210
      %s213 = sphi 0, %s212
      %s227 = sphi 0, %s213
      %s235 = sphi 0, %s237
      %s238 = sphi 0, %s235
      %s239 = sphi 0, %s238
      %s255 = sphi 0, %s239
      %s261 = sphi 0, %s263
      %s264 = sphi 0, %s261
      %s265 = sphi 0, %s264
      %s281 = sphi 0, %s265
    $region4: #{tpu_custom_call.1} parent=1 // loop_header_branch
      %29 = sbr.rel (%p27) target = $region8
    $region5: #{tpu_custom_call.1} parent=1 // loop_body
      %s31 = ssub.s32 %s26, 1
      %s32 = ssub.s32 %s26, 2
      %s39 = sadd.s32 1, %s34
      %p40 = scmp.ge.s32.totalorder %s39, 2
      %s41 = scalar_select %p40, 0, %s39
      %s42 = sadd.s32 1, %s33
      %s43 = scalar_select %p40, %s42, %s33
      %p44 = scmp.ge.s32.totalorder %s43, 2
      %s45 = scalar_select %p44, 0, %s43
      %s46 = ssub.s32 %s33, %s45
      %s47 = ssub.s32 %s34, %s41
      %s48 = sor.u32 %s46, %s47
      %p49 = scmp.eq.s32.totalorder %s48, 0
      %s51 = sadd.s32 %s50, 1
      %s52 = scalar_select %p49, %s50, %s51
      %p55 = pneg %p49
      %p56 = scmp.eq.s32.totalorder %s26, 3
      %p57 = por %p55, %p56
      %p58 = scmp.ne.s32.totalorder %s50, %s53
      %p59 = scmp.eq.s32.totalorder %s26, 0
      %p60 = por %p58, %p59
      %p61 = scmp.ne.s32.totalorder %s50, %s53
      %p62 = scmp.eq.s32.totalorder %s31, 3
      %p63 = por %p61, %p62
      %p64 = scmp.ne.s32.totalorder %s53, %s54
      %p65 = scmp.eq.s32.totalorder %s31, 0
      %p66 = por %p64, %p65
      %p67 = scmp.ne.s32.totalorder %s53, %s54
      %p68 = scmp.eq.s32.totalorder %s32, 3
      %p69 = por %p67, %p68
      %p71 = scmp.ne.s32.totalorder %s54, %s70
      %p72 = scmp.eq.s32.totalorder %s32, 0
      %p73 = por %p71, %p72
      %s74 = ssub.s32 %s33, %s45
      %p75 = scmp.eq.s32.totalorder %s74, 0
      %s77 = sadd.s32 %s76, 1
      %s78 = scalar_select %p75, %s76, %s77
      %p81 = pneg %p75
      %p82 = scmp.eq.s32.totalorder %s26, 3
      %p83 = por %p81, %p82
      %p84 = scmp.ne.s32.totalorder %s76, %s79
      %p85 = scmp.eq.s32.totalorder %s26, 0
      %p86 = por %p84, %p85
      %p87 = scmp.ne.s32.totalorder %s76, %s79
      %p88 = scmp.eq.s32.totalorder %s31, 3
      %p89 = por %p87, %p88
      %p90 = scmp.ne.s32.totalorder %s79, %s80
      %p91 = scmp.eq.s32.totalorder %s31, 0
      %p92 = por %p90, %p91
      %p93 = scmp.ne.s32.totalorder %s79, %s80
      %p94 = scmp.eq.s32.totalorder %s32, 3
      %p95 = por %p93, %p94
      %p97 = scmp.ne.s32.totalorder %s80, %s96
      %p98 = scmp.eq.s32.totalorder %s32, 0
      %p99 = por %p97, %p98
      %s100 = ssub.s32 %s33, %s45
      %p101 = scmp.eq.s32.totalorder %s100, 0
      %s103 = sadd.s32 %s102, 1
      %s104 = scalar_select %p101, %s102, %s103
      %p107 = pneg %p101
      %p108 = scmp.eq.s32.totalorder %s26, 3
      %p109 = por %p107, %p108
      %p110 = scmp.ne.s32.totalorder %s102, %s105
      %p111 = scmp.eq.s32.totalorder %s26, 0
      %p112 = por %p110, %p111
      %p113 = scmp.ne.s32.totalorder %s102, %s105
      %p114 = scmp.eq.s32.totalorder %s31, 3
      %p115 = por %p113, %p114
      %p116 = scmp.ne.s32.totalorder %s105, %s106
      %p117 = scmp.eq.s32.totalorder %s31, 0
      %p118 = por %p116, %p117
      %p119 = scmp.ne.s32.totalorder %s105, %s106
      %p120 = scmp.eq.s32.totalorder %s32, 3
      %p121 = por %p119, %p120
      %p123 = scmp.ne.s32.totalorder %s106, %s122
      %p124 = scmp.eq.s32.totalorder %s32, 0
      %p125 = por %p123, %p124
      %s127 = sadd.s32 %s126, 1
      %p130 = scmp.eq.s32.totalorder %s26, 3
      %p131 = scmp.ne.s32.totalorder %s126, %s128
      %p132 = scmp.eq.s32.totalorder %s26, 0
      %p133 = por %p131, %p132
      %p134 = scmp.ne.s32.totalorder %s126, %s128
      %p135 = scmp.eq.s32.totalorder %s31, 3
      %p136 = por %p134, %p135
      %p137 = scmp.ne.s32.totalorder %s128, %s129
      %p138 = scmp.eq.s32.totalorder %s31, 0
      %p139 = por %p137, %p138
      %p140 = scmp.ne.s32.totalorder %s128, %s129
      %p141 = scmp.eq.s32.totalorder %s32, 3
      %p142 = por %p140, %p141
      %p144 = scmp.ne.s32.totalorder %s129, %s143
      %p145 = scmp.eq.s32.totalorder %s32, 0
      %p146 = por %p144, %p145
      %s148 = sadd.s32 %s147, 1
      %p151 = scmp.eq.s32.totalorder %s26, 3
      %p152 = scmp.ne.s32.totalorder %s147, %s149
      %p153 = scmp.eq.s32.totalorder %s26, 0
      %p154 = por %p152, %p153
      %p155 = scmp.ne.s32.totalorder %s147, %s149
      %p156 = scmp.eq.s32.totalorder %s31, 3
      %p157 = por %p155, %p156
      %p158 = scmp.ne.s32.totalorder %s149, %s150
      %p159 = scmp.eq.s32.totalorder %s31, 0
      %p160 = por %p158, %p159
      %p161 = scmp.ne.s32.totalorder %s149, %s150
      %p162 = scmp.eq.s32.totalorder %s32, 3
      %p163 = por %p161, %p162
      %p165 = scmp.ne.s32.totalorder %s150, %s164
      %p166 = scmp.eq.s32.totalorder %s32, 0
      %p167 = por %p165, %p166
      %s169 = sadd.s32 %s168, 1
      %p172 = scmp.eq.s32.totalorder %s26, 3
      %p173 = scmp.ne.s32.totalorder %s168, %s170
      %p174 = scmp.eq.s32.totalorder %s26, 0
      %p175 = por %p173, %p174
      %p176 = scmp.ne.s32.totalorder %s168, %s170
      %p177 = scmp.eq.s32.totalorder %s31, 3
      %p178 = por %p176, %p177
      %p179 = scmp.ne.s32.totalorder %s170, %s171
      %p180 = scmp.eq.s32.totalorder %s31, 0
      %p181 = por %p179, %p180
      %p182 = scmp.ne.s32.totalorder %s170, %s171
      %p183 = scmp.eq.s32.totalorder %s32, 3
      %p184 = por %p182, %p183
      %p186 = scmp.ne.s32.totalorder %s171, %s185
      %p187 = scmp.eq.s32.totalorder %s32, 0
      %p188 = por %p186, %p187
      %s190 = sadd.s32 %s189, 1
      %p193 = scmp.eq.s32.totalorder %s26, 3
      %p194 = scmp.ne.s32.totalorder %s189, %s191
      %p195 = scmp.eq.s32.totalorder %s26, 0
      %p196 = por %p194, %p195
      %p197 = scmp.ne.s32.totalorder %s189, %s191
      %p198 = scmp.eq.s32.totalorder %s31, 3
      %p199 = por %p197, %p198
      %p200 = scmp.ne.s32.totalorder %s191, %s192
      %p201 = scmp.eq.s32.totalorder %s31, 0
      %p202 = por %p200, %p201
      %p203 = scmp.ne.s32.totalorder %s191, %s192
      %p204 = scmp.eq.s32.totalorder %s32, 3
      %p205 = por %p203, %p204
      %p207 = scmp.ne.s32.totalorder %s192, %s206
      %p208 = scmp.eq.s32.totalorder %s32, 0
      %p209 = por %p207, %p208
      %s211 = sadd.s32 %s210, 1
      %p214 = scmp.eq.s32.totalorder %s26, 3
      %p215 = scmp.ne.s32.totalorder %s210, %s212
      %p216 = scmp.eq.s32.totalorder %s26, 0
      %p217 = por %p215, %p216
      %p218 = scmp.ne.s32.totalorder %s210, %s212
      %p219 = scmp.eq.s32.totalorder %s31, 3
      %p220 = por %p218, %p219
      %p221 = scmp.ne.s32.totalorder %s212, %s213
      %p222 = scmp.eq.s32.totalorder %s31, 0
      %p223 = por %p221, %p222
      %p224 = scmp.ne.s32.totalorder %s212, %s213
      %p225 = scmp.eq.s32.totalorder %s32, 3
      %p226 = por %p224, %p225
      %p228 = scmp.ne.s32.totalorder %s213, %s227
      %p229 = scmp.eq.s32.totalorder %s32, 0
      %p230 = por %p228, %p229
      %s231 = ssub.s32 %s33, %s45
      %s232 = ssub.s32 %s34, %s41
      %s233 = sor.u32 %s231, %s232
      %p234 = scmp.eq.s32.totalorder %s233, 0
      %s236 = sadd.s32 %s235, 1
      %s237 = scalar_select %p234, %s235, %s236
      %p240 = pneg %p234
      %p241 = scmp.eq.s32.totalorder %s26, 3
      %p242 = por %p240, %p241
      %p243 = scmp.ne.s32.totalorder %s235, %s238
      %p244 = scmp.eq.s32.totalorder %s26, 0
      %p245 = por %p243, %p244
      %p246 = scmp.ne.s32.totalorder %s235, %s238
      %p247 = scmp.eq.s32.totalorder %s31, 3
      %p248 = por %p246, %p247
      %p249 = scmp.ne.s32.totalorder %s238, %s239
      %p250 = scmp.eq.s32.totalorder %s31, 0
      %p251 = por %p249, %p250
      %p252 = scmp.ne.s32.totalorder %s238, %s239
      %p253 = scmp.eq.s32.totalorder %s32, 3
      %p254 = por %p252, %p253
      %p256 = scmp.ne.s32.totalorder %s239, %s255
      %p257 = scmp.eq.s32.totalorder %s32, 0
      %p258 = por %p256, %p257
      %s259 = ssub.s32 %s33, %s45
      %p260 = scmp.eq.s32.totalorder %s259, 0
      %s262 = sadd.s32 %s261, 1
      %s263 = scalar_select %p260, %s261, %s262
      %p266 = pneg %p260
      %p267 = scmp.eq.s32.totalorder %s26, 3
      %p268 = por %p266, %p267
      %p269 = scmp.ne.s32.totalorder %s261, %s264
      %p270 = scmp.eq.s32.totalorder %s26, 0
      %p271 = por %p269, %p270
      %p272 = scmp.ne.s32.totalorder %s261, %s264
      %p273 = scmp.eq.s32.totalorder %s31, 3
      %p274 = por %p272, %p273
      %p275 = scmp.ne.s32.totalorder %s264, %s265
      %p276 = scmp.eq.s32.totalorder %s31, 0
      %p277 = por %p275, %p276
      %p278 = scmp.ne.s32.totalorder %s264, %s265
      %p279 = scmp.eq.s32.totalorder %s32, 3
      %p280 = por %p278, %p279
      %p282 = scmp.ne.s32.totalorder %s265, %s281
      %p283 = scmp.eq.s32.totalorder %s32, 0
      %p284 = por %p282, %p283
      %p285 = scmp.le.s32.totalorder 1, %s26
      %p286 = scmp.lt.s32.totalorder %s26, 5
      %p287 = pnand %p285, %p286
      %p288 = pneg %p287
      // Predicated region
      $region9: #{tpu_custom_call.1} parent=5 // pred_check
        _
      $region10: #{tpu_custom_call.1} parent=5 // pred_check_branch
        %290 = sbr.rel (%p287) target = $region12
      $region11: #{tpu_custom_call.1} parent=5 // pred_region
        %s291 = ssub.s32 %s26, 1
        // Predicated region
        $region13: #{tpu_custom_call.1} parent=11 // pred_check
          %p292 = pneg %p139
        $region14: #{tpu_custom_call.1} parent=11 // pred_check_branch
          %294 = sbr.rel (%p292) target = $region16
        $region15: #{tpu_custom_call.1} parent=11 // pred_region
          %s296 = ssub.s32 2048, 2048
          %297 = vsyncadd [#allocation8], %s296
          %s298 = sshll.u32 [#allocation7], 4
          %s299 = int_to_ptr.vmem [resolvable:$true] %s298
          %304 = dma.hbm_to_vmem [thread:$0]  %s3, 2048, %s299, [#allocation8], 128, 128, 8
        $region16: #{tpu_custom_call.1} parent=11 // pred_fallthru
          _
        // Predicated region
        $region17: #{tpu_custom_call.1} parent=11 // pred_check
          %p305 = pneg %p160
        $region18: #{tpu_custom_call.1} parent=11 // pred_check_branch
          %307 = sbr.rel (%p305) target = $region20
        $region19: #{tpu_custom_call.1} parent=11 // pred_region
          _
        $region20: #{tpu_custom_call.1} parent=11 // pred_fallthru
          _
        // Predicated region
        $region21: #{tpu_custom_call.1} parent=11 // pred_check
          %p308 = pneg %p181
        $region22: #{tpu_custom_call.1} parent=11 // pred_check_branch
          %310 = sbr.rel (%p308) target = $region24
        $region23: #{tpu_custom_call.1} parent=11 // pred_region
          %s312 = ssub.s32 2048, 2048
          %313 = vsyncadd [#allocation8], %s312
          %s314 = sshll.u32 [#allocation9], 4
          %s315 = int_to_ptr.vmem [resolvable:$true] %s314
          %320 = dma.hbm_to_vmem [thread:$0]  %s5, 2048, %s315, [#allocation8], 128, 128, 8
        $region24: #{tpu_custom_call.1} parent=11 // pred_fallthru
          _
        // Predicated region
        $region25: #{tpu_custom_call.1} parent=11 // pred_check
          %p321 = pneg %p202
        $region26: #{tpu_custom_call.1} parent=11 // pred_check_branch
          %323 = sbr.rel (%p321) target = $region28
        $region27: #{tpu_custom_call.1} parent=11 // pred_region
          _
        $region28: #{tpu_custom_call.1} parent=11 // pred_fallthru
          _
        // Predicated region
        $region29: #{tpu_custom_call.1} parent=11 // pred_check
          %p324 = pneg %p223
        $region30: #{tpu_custom_call.1} parent=11 // pred_check_branch
          %326 = sbr.rel (%p324) target = $region32
        $region31: #{tpu_custom_call.1} parent=11 // pred_region
          _
        $region32: #{tpu_custom_call.1} parent=11 // pred_fallthru
          _
      $region12: #{tpu_custom_call.1} parent=5 // pred_fallthru
        _
      %p327 = scmp.lt.s32.totalorder %s26, 4
      // Predicated region
      $region33: #{tpu_custom_call.1} parent=5 // pred_check
        %p328 = pneg %p327
      $region34: #{tpu_custom_call.1} parent=5 // pred_check_branch
        %330 = sbr.rel (%p328) target = $region36
      $region35: #{tpu_custom_call.1} parent=5 // pred_region
        // Predicated region
        $region37: #{tpu_custom_call.1} parent=35 // pred_check
          %p331 = pneg %p60
        $region38: #{tpu_custom_call.1} parent=35 // pred_check_branch
          %333 = sbr.rel (%p331) target = $region40
        $region39: #{tpu_custom_call.1} parent=35 // pred_region
          %s334 = sand.u32 %s50, 1
          %s335 = scalar_lea.sflag [#allocation5], %s334
          %s336 = sand.u32 %s50, 1
          %s337 = smul.addr %s336, 8
          %s338 = scalar_lea.vmem [#allocation4], %s337
          %s340 = ssub.s32 128, 128
          %341 = vsyncadd %s335, %s340
          %s342 = smul.addr %s33, 2
          %s343 = sadd.s32 %s34, %s342
          %s344 = smul.addr %s343, 128
          %s345 = scalar_lea.hbm %s0, %s344
          %s347 = sshll.u32 %s338, 4
          %s348 = int_to_ptr.vmem [resolvable:$true] %s347
          %350 = dma.hbm_to_vmem [thread:$0]  %s345, 128, %s348, %s335
        $region40: #{tpu_custom_call.1} parent=35 // pred_fallthru
          _
        // Predicated region
        $region41: #{tpu_custom_call.1} parent=35 // pred_check
          %p351 = pneg %p86
        $region42: #{tpu_custom_call.1} parent=35 // pred_check_branch
          %353 = sbr.rel (%p351) target = $region44
        $region43: #{tpu_custom_call.1} parent=35 // pred_region
          %p354 = scmp.lt.s32.totalorder %s33, 1
          %s355 = scalar_select %p354, %s33, 1
          %s356 = scalar_lea.vmem %s1, %s355
        $region44: #{tpu_custom_call.1} parent=35 // pred_fallthru
          _
        // Predicated region
        $region45: #{tpu_custom_call.1} parent=35 // pred_check
          %p357 = pneg %p112
        $region46: #{tpu_custom_call.1} parent=35 // pred_check_branch
          %359 = sbr.rel (%p357) target = $region48
        $region47: #{tpu_custom_call.1} parent=35 // pred_region
          %p360 = scmp.lt.s32.totalorder %s33, 1
          %s361 = scalar_select %p360, %s33, 1
          %s362 = scalar_lea.vmem %s2, %s361
        $region48: #{tpu_custom_call.1} parent=35 // pred_fallthru
          _
      $region36: #{tpu_custom_call.1} parent=5 // pred_fallthru
        _
      %p363 = scmp.le.s32.totalorder 1, %s26
      %p364 = scmp.lt.s32.totalorder %s26, 5
      %p365 = pnand %p363, %p364
      %p366 = pneg %p365
      // Predicated region
      $region49: #{tpu_custom_call.1} parent=5 // pred_check
        _
      $region50: #{tpu_custom_call.1} parent=5 // pred_check_branch
        %368 = sbr.rel (%p365) target = $region52
      $region51: #{tpu_custom_call.1} parent=5 // pred_region
        %s369 = ssub.s32 %s26, 1
        %s370 = sand.u32 %s53, 1
        %s371 = scalar_lea.sflag [#allocation5], %s370
        %s372 = sand.u32 %s53, 1
        %s373 = smul.addr %s372, 8
        %s374 = scalar_lea.vmem [#allocation4], %s373
        // Predicated region
        $region53: #{tpu_custom_call.1} parent=51 // pred_check
          %p375 = pneg %p66
        $region54: #{tpu_custom_call.1} parent=51 // pred_check_branch
          %377 = sbr.rel (%p375) target = $region56
        $region55: #{tpu_custom_call.1} parent=51 // pred_region
          %378 = dma.done %s371, 128
        $region56: #{tpu_custom_call.1} parent=51 // pred_fallthru
          _
        // Predicated region
        $region57: #{tpu_custom_call.1} parent=51 // pred_check
          %p379 = pneg %p139
        $region58: #{tpu_custom_call.1} parent=51 // pred_check_branch
          %381 = sbr.rel (%p379) target = $region60
        $region59: #{tpu_custom_call.1} parent=51 // pred_region
          %382 = dma.done [#allocation8], 2048
        $region60: #{tpu_custom_call.1} parent=51 // pred_fallthru
          _
        // Predicated region
        $region61: #{tpu_custom_call.1} parent=51 // pred_check
          %p383 = pneg %p181
        $region62: #{tpu_custom_call.1} parent=51 // pred_check_branch
          %385 = sbr.rel (%p383) target = $region64
        $region63: #{tpu_custom_call.1} parent=51 // pred_region
          %386 = dma.done [#allocation8], 2048
        $region64: #{tpu_custom_call.1} parent=51 // pred_fallthru
          _
        %s387 = sand.u32 %s53, 1
        %s388 = scalar_lea.sflag [#allocation5], %s387
        %s389 = sand.u32 %s53, 1
        %s390 = smul.addr %s389, 8
        %s391 = scalar_lea.vmem [#allocation4], %s390
        %p392 = pneg %p66
        %p393 = pneg %p63
        %p394 = scmp.lt.s32.totalorder %s35, 1
        %s395 = scalar_select %p394, %s35, 1
        %s396 = scalar_lea.vmem %s1, %s395
        %p397 = pneg %p92
        %p398 = pneg %p89
        %p399 = scmp.lt.s32.totalorder %s35, 1
        %s400 = scalar_select %p399, %s35, 1
        %s401 = scalar_lea.vmem %s2, %s400
        %p402 = pneg %p118
        %p403 = pneg %p115
        %p404 = pneg %p139
        %p405 = pneg %p136
        %p406 = pneg %p160
        %p407 = pneg %p157
        %p408 = pneg %p181
        %p409 = pneg %p178
        %p410 = pneg %p202
        %p411 = pneg %p199
        %p412 = pneg %p223
        %p413 = pneg %p220
        %p414 = pneg %p251
        %p415 = pneg %p248
        %s416 = sand.u32 %s238, 1
        %s417 = scalar_lea.sflag [#allocation6], %s416
        %s418 = sand.u32 %s238, 1
        %s419 = smul.addr %s418, 8
        %s420 = scalar_lea.vmem [#allocation10], %s419
        %p421 = pneg %p277
        %p422 = pneg %p274
        %s423 = sand.u32 %s264, 1
        %s424 = scalar_lea.sflag [#allocation12], %s423
        %s425 = sand.u32 %s264, 1
        %s426 = scalar_lea.vmem [#allocation11], %s425
        %p427 = scmp.lt.s32.totalorder %s35, 1
        %s428 = scalar_select %p427, %s35, 1
        %s429 = scalar_lea.vmem %s1, %s428
        %p430 = scmp.lt.s32.totalorder %s35, 1
        %s431 = scalar_select %p430, %s35, 1
        %s432 = scalar_lea.vmem %s2, %s431
        %p434 = scmp.eq.s32.totalorder %s36, 0
        // Predicated region
        $region65: #{tpu_custom_call.1} parent=51 // pred_check
          %p435 = pneg %p434
        $region66: #{tpu_custom_call.1} parent=51 // pred_check_branch
          %437 = sbr.rel (%p435) target = $region68
        $region67: #{tpu_custom_call.1} parent=51 // pred_region
          %v438 = vld [vmem:[%s429] sm:$0x1]
          %439 = vst [vmem:[#allocation2] sm:$0x1] %v438
          %v440 = vld [vmem:[%s432] sm:$0x1]
          %441 = vst [vmem:[#allocation3] sm:$0x1] %v440
        $region68: #{tpu_custom_call.1} parent=51 // pred_fallthru
          _
        %v442 = vld [vmem:[%s374] sm:$0xff]
        %v443 = vlaneseq
        %v444 = vshrl.u32 %v443, 7
        %vm445 = vcmp.eq.s32.totalorder %v444, 0
        %v446 = vpack.c.bf16 %v442, %v442
        %v447 = vld [vmem:[#allocation7] sm:$0xff]
        %v448 = vld [vmem:[#allocation7 + $0x8] sm:$0xff]
        %v449 = vld [vmem:[#allocation7 + $0x10] sm:$0xff]
        %v450 = vld [vmem:[#allocation7 + $0x18] sm:$0xff]
        %v451 = vld [vmem:[#allocation7 + $0x20] sm:$0xff]
        %v452 = vld [vmem:[#allocation7 + $0x28] sm:$0xff]
        %v453 = vld [vmem:[#allocation7 + $0x30] sm:$0xff]
        %v454 = vld [vmem:[#allocation7 + $0x38] sm:$0xff]
        %v455 = vld [vmem:[#allocation7 + $0x40] sm:$0xff]
        %v456 = vld [vmem:[#allocation7 + $0x48] sm:$0xff]
        %v457 = vld [vmem:[#allocation7 + $0x50] sm:$0xff]
        %v458 = vld [vmem:[#allocation7 + $0x58] sm:$0xff]
        %v459 = vld [vmem:[#allocation7 + $0x60] sm:$0xff]
        %v460 = vld [vmem:[#allocation7 + $0x68] sm:$0xff]
        %v461 = vld [vmem:[#allocation7 + $0x70] sm:$0xff]
        %v462 = vld [vmem:[#allocation7 + $0x78] sm:$0xff]
        %v479 = vunpack.c.l.b16 %v447
        %v480 = vunpack.c.h.b16 %v447
        %v481 = vunpack.c.l.b16 %v448
        %v482 = vunpack.c.h.b16 %v448
        %v483 = vunpack.c.l.b16 %v449
        %v484 = vunpack.c.h.b16 %v449
        %v485 = vunpack.c.l.b16 %v450
        %v486 = vunpack.c.h.b16 %v450
        %v487 = vunpack.c.l.b16 %v451
        %v488 = vunpack.c.h.b16 %v451
        %v489 = vunpack.c.l.b16 %v452
        %v490 = vunpack.c.h.b16 %v452
        %v491 = vunpack.c.l.b16 %v453
        %v492 = vunpack.c.h.b16 %v453
        %v493 = vunpack.c.l.b16 %v454
        %v494 = vunpack.c.h.b16 %v454
        %v495 = vunpack.c.l.b16 %v455
        %v496 = vunpack.c.h.b16 %v455
        %v497 = vunpack.c.l.b16 %v456
        %v498 = vunpack.c.h.b16 %v456
        %v499 = vunpack.c.l.b16 %v457
        %v500 = vunpack.c.h.b16 %v457
        %v501 = vunpack.c.l.b16 %v458
        %v502 = vunpack.c.h.b16 %v458
        %v503 = vunpack.c.l.b16 %v459
        %v504 = vunpack.c.h.b16 %v459
        %v505 = vunpack.c.l.b16 %v460
        %v506 = vunpack.c.h.b16 %v460
        %v507 = vunpack.c.l.b16 %v461
        %v508 = vunpack.c.h.b16 %v461
        %v509 = vunpack.c.l.b16 %v462
        %v510 = vunpack.c.h.b16 %v462
        %v511 = vpack.c.b16 %v481, %v479
        %v512 = vpack.c.b16 %v482, %v480
        %v513 = vpack.c.b16 %v485, %v483
        %v514 = vpack.c.b16 %v486, %v484
        %v515 = vpack.c.b16 %v489, %v487
        %v516 = vpack.c.b16 %v490, %v488
        %v517 = vpack.c.b16 %v493, %v491
        %v518 = vpack.c.b16 %v494, %v492
        %v519 = vpack.c.b16 %v497, %v495
        %v520 = vpack.c.b16 %v498, %v496
        %v521 = vpack.c.b16 %v501, %v499
        %v522 = vpack.c.b16 %v502, %v500
        %v523 = vpack.c.b16 %v505, %v503
        %v524 = vpack.c.b16 %v506, %v504
        %v525 = vpack.c.b16 %v509, %v507
        %v526 = vpack.c.b16 %v510, %v508
        %543 = vmatprep.subr.bf16.mxu0 %v512
        %544 = vmatpush1.bf16.msra.mxu0 %v511
        %545 = vmatprep.subr.bf16.mxu0 %v514
        %546 = vmatpush1.bf16.msra.mxu0 %v513
        %547 = vmatprep.subr.bf16.mxu0 %v516
        %548 = vmatpush1.bf16.msra.mxu0 %v515
        %549 = vmatprep.subr.bf16.mxu0 %v518
        %550 = vmatpush1.bf16.msra.mxu0 %v517
        %551 = vmatprep.subr.bf16.mxu0 %v520
        %552 = vmatpush1.bf16.msra.mxu0 %v519
        %553 = vmatprep.subr.bf16.mxu0 %v522
        %554 = vmatpush1.bf16.msra.mxu0 %v521
        %555 = vmatprep.subr.bf16.mxu0 %v524
        %556 = vmatpush1.bf16.msra.mxu0 %v523
        %557 = vmatprep.subr.bf16.mxu0 %v526
        %558 = vmatpush1.bf16.msra.mxu0 %v525
        %559 = vmatprep.subr.bf16.mxu0 0
        %560 = vmatpush1.bf16.msra.mxu0 0
        %561 = vmatprep.subr.bf16.mxu0 0
        %562 = vmatpush1.bf16.msra.mxu0 0
        %563 = vmatprep.subr.bf16.mxu0 0
        %564 = vmatpush1.bf16.msra.mxu0 0
        %565 = vmatprep.subr.bf16.mxu0 0
        %566 = vmatpush1.bf16.msra.mxu0 0
        %567 = vmatprep.subr.bf16.mxu0 0
        %568 = vmatpush1.bf16.msra.mxu0 0
        %569 = vmatprep.subr.bf16.mxu0 0
        %570 = vmatpush1.bf16.msra.mxu0 0
        %571 = vmatprep.subr.bf16.mxu0 0
        %572 = vmatpush1.bf16.msra.mxu0 0
        %573 = vmatprep.subr.bf16.mxu0 0
        %574 = vmatpush1.bf16.msra.mxu0 0
        %575 = vmatprep.mubr.bf16.mxu0 0
        %576 = vmatmul.mubr.bf16.gmra.mrb[0].mxu0 %v446
        %v577 = vpop.f32.mrb[0].mxu0
        %v578 = vadd.f32 0.0, %v577
        %v579 = vpop.f32.mrb[0].mxu0
        %v580 = vadd.f32 0.0, %v579
        %v581 = vpop.f32.mrb[0].mxu0
        %v582 = vpop.f32.mrb[0].mxu0
        %583 = vdwg.mxu0
        %v584 = vld [vmem:[#allocation2] sm:$0x1]
        %v585 = vrot.slane %v578, 7
        %v586 = vsel %vm445, 1, 0
        %vm587 = vcmp.eq.s32.totalorder %v586, 1
        %v589 = vlaneseq
        %v590 = vshrl.u32 %v589, 7
        %v591 = vsub.s32 0, %v590
        %v592 = vrot.slane %v584, %v591
        %v594 = vsel %vm587, %v592, %v585
        %v595 = vadd.f32 %v594, %v580
        %v596 = vld [vmem:[%s4] sm:$0x1]
        %v598 = vlaneseq
        %v599 = vshrl.u32 %v598, 7
        %v600 = vsub.s32 0, %v599
        %v601 = vrot.slane %v596, %v600
        %v603 = vadd.f32 %v595, %v601
        %v604 = vpack.c.bf16 %v603, %v603
        %v605 = vld [vmem:[#allocation9] sm:$0xff]
        %v606 = vld [vmem:[#allocation9 + $0x8] sm:$0xff]
        %v607 = vld [vmem:[#allocation9 + $0x10] sm:$0xff]
        %v608 = vld [vmem:[#allocation9 + $0x18] sm:$0xff]
        %v609 = vld [vmem:[#allocation9 + $0x20] sm:$0xff]
        %v610 = vld [vmem:[#allocation9 + $0x28] sm:$0xff]
        %v611 = vld [vmem:[#allocation9 + $0x30] sm:$0xff]
        %v612 = vld [vmem:[#allocation9 + $0x38] sm:$0xff]
        %v613 = vld [vmem:[#allocation9 + $0x40] sm:$0xff]
        %v614 = vld [vmem:[#allocation9 + $0x48] sm:$0xff]
        %v615 = vld [vmem:[#allocation9 + $0x50] sm:$0xff]
        %v616 = vld [vmem:[#allocation9 + $0x58] sm:$0xff]
        %v617 = vld [vmem:[#allocation9 + $0x60] sm:$0xff]
        %v618 = vld [vmem:[#allocation9 + $0x68] sm:$0xff]
        %v619 = vld [vmem:[#allocation9 + $0x70] sm:$0xff]
        %v620 = vld [vmem:[#allocation9 + $0x78] sm:$0xff]
        %v637 = vunpack.c.l.b16 %v605
        %v638 = vunpack.c.h.b16 %v605
        %v639 = vunpack.c.l.b16 %v606
        %v640 = vunpack.c.h.b16 %v606
        %v641 = vunpack.c.l.b16 %v607
        %v642 = vunpack.c.h.b16 %v607
        %v643 = vunpack.c.l.b16 %v608
        %v644 = vunpack.c.h.b16 %v608
        %v645 = vunpack.c.l.b16 %v609
        %v646 = vunpack.c.h.b16 %v609
        %v647 = vunpack.c.l.b16 %v610
        %v648 = vunpack.c.h.b16 %v610
        %v649 = vunpack.c.l.b16 %v611
        %v650 = vunpack.c.h.b16 %v611
        %v651 = vunpack.c.l.b16 %v612
        %v652 = vunpack.c.h.b16 %v612
        %v653 = vunpack.c.l.b16 %v613
        %v654 = vunpack.c.h.b16 %v613
        %v655 = vunpack.c.l.b16 %v614
        %v656 = vunpack.c.h.b16 %v614
        %v657 = vunpack.c.l.b16 %v615
        %v658 = vunpack.c.h.b16 %v615
        %v659 = vunpack.c.l.b16 %v616
        %v660 = vunpack.c.h.b16 %v616
        %v661 = vunpack.c.l.b16 %v617
        %v662 = vunpack.c.h.b16 %v617
        %v663 = vunpack.c.l.b16 %v618
        %v664 = vunpack.c.h.b16 %v618
        %v665 = vunpack.c.l.b16 %v619
        %v666 = vunpack.c.h.b16 %v619
        %v667 = vunpack.c.l.b16 %v620
        %v668 = vunpack.c.h.b16 %v620
        %v669 = vpack.c.b16 %v639, %v637
        %v670 = vpack.c.b16 %v640, %v638
        %v671 = vpack.c.b16 %v643, %v641
        %v672 = vpack.c.b16 %v644, %v642
        %v673 = vpack.c.b16 %v647, %v645
        %v674 = vpack.c.b16 %v648, %v646
        %v675 = vpack.c.b16 %v651, %v649
        %v676 = vpack.c.b16 %v652, %v650
        %v677 = vpack.c.b16 %v655, %v653
        %v678 = vpack.c.b16 %v656, %v654
        %v679 = vpack.c.b16 %v659, %v657
        %v680 = vpack.c.b16 %v660, %v658
        %v681 = vpack.c.b16 %v663, %v661
        %v682 = vpack.c.b16 %v664, %v662
        %v683 = vpack.c.b16 %v667, %v665
        %v684 = vpack.c.b16 %v668, %v666
        %701 = vmatprep.subr.bf16.mxu0 %v670
        %702 = vmatpush1.bf16.msra.mxu0 %v669
        %703 = vmatprep.subr.bf16.mxu0 %v672
        %704 = vmatpush1.bf16.msra.mxu0 %v671
        %705 = vmatprep.subr.bf16.mxu0 %v674
        %706 = vmatpush1.bf16.msra.mxu0 %v673
        %707 = vmatprep.subr.bf16.mxu0 %v676
        %708 = vmatpush1.bf16.msra.mxu0 %v675
        %709 = vmatprep.subr.bf16.mxu0 %v678
        %710 = vmatpush1.bf16.msra.mxu0 %v677
        %711 = vmatprep.subr.bf16.mxu0 %v680
        %712 = vmatpush1.bf16.msra.mxu0 %v679
        %713 = vmatprep.subr.bf16.mxu0 %v682
        %714 = vmatpush1.bf16.msra.mxu0 %v681
        %715 = vmatprep.subr.bf16.mxu0 %v684
        %716 = vmatpush1.bf16.msra.mxu0 %v683
        %717 = vmatprep.subr.bf16.mxu0 0
        %718 = vmatpush1.bf16.msra.mxu0 0
        %719 = vmatprep.subr.bf16.mxu0 0
        %720 = vmatpush1.bf16.msra.mxu0 0
        %721 = vmatprep.subr.bf16.mxu0 0
        %722 = vmatpush1.bf16.msra.mxu0 0
        %723 = vmatprep.subr.bf16.mxu0 0
        %724 = vmatpush1.bf16.msra.mxu0 0
        %725 = vmatprep.subr.bf16.mxu0 0
        %726 = vmatpush1.bf16.msra.mxu0 0
        %727 = vmatprep.subr.bf16.mxu0 0
        %728 = vmatpush1.bf16.msra.mxu0 0
        %729 = vmatprep.subr.bf16.mxu0 0
        %730 = vmatpush1.bf16.msra.mxu0 0
        %731 = vmatprep.subr.bf16.mxu0 0
        %732 = vmatpush1.bf16.msra.mxu0 0
        %733 = vmatprep.mubr.bf16.mxu0 0
        %734 = vmatmul.mubr.bf16.gmra.mrb[0].mxu0 %v604
        %v735 = vpop.f32.mrb[0].mxu0
        %v736 = vadd.f32 0.0, %v735
        %v737 = vpop.f32.mrb[0].mxu0
        %v738 = vadd.f32 0.0, %v737
        %v739 = vpop.f32.mrb[0].mxu0
        %v740 = vpop.f32.mrb[0].mxu0
        %741 = vdwg.mxu0
        %v742 = vld [vmem:[#allocation3] sm:$0x1]
        %v743 = vrot.slane %v736, 7
        %v745 = vlaneseq
        %v746 = vshrl.u32 %v745, 7
        %v747 = vsub.s32 0, %v746
        %v748 = vrot.slane %v742, %v747
        %v750 = vsel %vm587, %v748, %v743
        %v751 = vadd.f32 %v750, %v738
        %v752 = vld [vmem:[%s6] sm:$0x1]
        %v754 = vlaneseq
        %v755 = vshrl.u32 %v754, 7
        %v756 = vsub.s32 0, %v755
        %v757 = vrot.slane %v752, %v756
        %v759 = vadd.f32 %v751, %v757
        %v760 = vadd.f32 %v759, %v442
        %v761 = vmul.f32 %v760, %v760
        %762 = vadd.xlane.f32.xlu0 %v761
        %v763 = vpop.xlane.xlu0 %762
        %v764 = vmul.f32 %v763, 0.03125
        %v765 = vadd.f32 %v764, 1e-06
        %v766 = vrsqrt.pop %v765
        %v767 = vmul.f32 %v760, %v766
        %v768 = vld [vmem:[%s7] sm:$0x1]
        %v770 = vlaneseq
        %v771 = vshrl.u32 %v770, 7
        %v772 = vsub.s32 0, %v771
        %v773 = vrot.slane %v768, %v772
        %v775 = vmul.f32 %v767, %v773
        %776 = vst [vmem:[%s420] sm:$0xff] %v775
        %777 = vst [vmem:[#allocation2 - $0x7] sm:$0x80] %v578
        %778 = vst [vmem:[#allocation3 - $0x7] sm:$0x80] %v736
        %p779 = scmp.eq.s32.totalorder %s36, 1
        // Predicated region
        $region69: #{tpu_custom_call.1} parent=51 // pred_check
          %p780 = pneg %p779
        $region70: #{tpu_custom_call.1} parent=51 // pred_check_branch
          %782 = sbr.rel (%p780) target = $region72
        $region71: #{tpu_custom_call.1} parent=51 // pred_region
          %783 = vst [vmem:[%s426 - $0x7] sm:$0x80] %v603
        $region72: #{tpu_custom_call.1} parent=51 // pred_fallthru
          _
        %s784 = sand.u32 %s238, 1
        %s785 = scalar_lea.sflag [#allocation6], %s784
        %s786 = sand.u32 %s238, 1
        %s787 = smul.addr %s786, 8
        %s788 = scalar_lea.vmem [#allocation10], %s787
        %s789 = sand.u32 %s264, 1
        %s790 = scalar_lea.sflag [#allocation12], %s789
        %s791 = sand.u32 %s264, 1
        %s792 = scalar_lea.vmem [#allocation11], %s791
        // Predicated region
        $region73: #{tpu_custom_call.1} parent=51 // pred_check
          %p793 = pneg %p248
        $region74: #{tpu_custom_call.1} parent=51 // pred_check_branch
          %795 = sbr.rel (%p793) target = $region76
        $region75: #{tpu_custom_call.1} parent=51 // pred_region
          %s797 = ssub.s32 128, 128
          %798 = vsyncadd %s785, %s797
          %s799 = smul.addr %s35, 2
          %s800 = sadd.s32 %s36, %s799
          %s801 = smul.addr %s800, 128
          %s802 = scalar_lea.hbm %s8, %s801
          %s804 = sshll.u32 %s788, 4
          %s805 = int_to_ptr.vmem [resolvable:$true] %s804
          %807 = dma.vmem_to_hbm [thread:$0]  %s805, 128, %s802, %s785
        $region76: #{tpu_custom_call.1} parent=51 // pred_fallthru
          _
        // Predicated region
        $region77: #{tpu_custom_call.1} parent=51 // pred_check
          %p808 = pneg %p274
        $region78: #{tpu_custom_call.1} parent=51 // pred_check_branch
          %810 = sbr.rel (%p808) target = $region80
        $region79: #{tpu_custom_call.1} parent=51 // pred_region
          %s812 = ssub.s32 16, 16
          %813 = vsyncadd %s790, %s812
          %s814 = smul.addr %s35, 16
          %s815 = scalar_lea.hbm %s9, %s814
          %s817 = sshll.u32 %s792, 4
          %s818 = int_to_ptr.vmem [resolvable:$true] %s817
          %820 = dma.vmem_to_hbm [thread:$0]  %s818, 16, %s815, %s790
        $region80: #{tpu_custom_call.1} parent=51 // pred_fallthru
          _
      $region52: #{tpu_custom_call.1} parent=5 // pred_fallthru
        _
      %p821 = scmp.le.s32.totalorder 2, %s26
      // Predicated region
      $region81: #{tpu_custom_call.1} parent=5 // pred_check
        %p822 = pneg %p821
      $region82: #{tpu_custom_call.1} parent=5 // pred_check_branch
        %824 = sbr.rel (%p822) target = $region84
      $region83: #{tpu_custom_call.1} parent=5 // pred_region
        %s825 = ssub.s32 %s26, 2
        // Predicated region
        $region85: #{tpu_custom_call.1} parent=83 // pred_check
          %p826 = pneg %p254
        $region86: #{tpu_custom_call.1} parent=83 // pred_check_branch
          %828 = sbr.rel (%p826) target = $region88
        $region87: #{tpu_custom_call.1} parent=83 // pred_region
          %s829 = sand.u32 %s239, 1
          %s830 = scalar_lea.sflag [#allocation6], %s829
          %s831 = sand.u32 %s239, 1
          %s832 = smul.addr %s831, 8
          %s833 = scalar_lea.vmem [#allocation10], %s832
          %834 = dma.done %s830, 128
        $region88: #{tpu_custom_call.1} parent=83 // pred_fallthru
          _
        // Predicated region
        $region89: #{tpu_custom_call.1} parent=83 // pred_check
          %p835 = pneg %p280
        $region90: #{tpu_custom_call.1} parent=83 // pred_check_branch
          %837 = sbr.rel (%p835) target = $region92
        $region91: #{tpu_custom_call.1} parent=83 // pred_region
          %s838 = sand.u32 %s265, 1
          %s839 = scalar_lea.sflag [#allocation12], %s838
          %s840 = sand.u32 %s265, 1
          %s841 = scalar_lea.vmem [#allocation11], %s840
          %842 = dma.done %s839, 16
        $region92: #{tpu_custom_call.1} parent=83 // pred_fallthru
          _
      $region84: #{tpu_custom_call.1} parent=5 // pred_fallthru
        _
    $region6: #{tpu_custom_call.1} parent=1 // loop_footer
      %s30 = sadd.s32 1, %s26
    $region7: #{tpu_custom_call.1} parent=1 // loop_footer_branch
      %25 = sbr.rel target = $region3
    $region8: #{tpu_custom_call.1} parent=1 // loop_exit
      _
    %843 = vsyncpa [#allocation5], 1
    %s844 = scalar_lea.sflag [#allocation5], 1
    %845 = vsyncpa %s844, 1
    %846 = vsyncpa [#allocation8], 1
    %847 = vsyncpa [#allocation6], 1
    %s848 = scalar_lea.sflag [#allocation6], 1
    %849 = vsyncpa %s848, 1
    %850 = vsyncpa [#allocation12], 1
    %s851 = scalar_lea.sflag [#allocation12], 1
    %852 = vsyncpa %s851, 1

</llo_original>
